<compile_context>
chip_gen: v6e
topology: v6e:2x2x1
jax: 0.10.0
libtpu: 0.0.40
codegen_flags: <defaults>
</compile_context>

<pallas_src>
import jax
import jax.numpy as jnp
from jax import lax
from jax.experimental import pallas as pl
from jax.experimental.pallas import tpu as pltpu


# ---------------------------------------------------------------------------
# Kernel: fused 2x2 gather + LayerNorm (post-matmul fold) + Linear (4C -> 2C).
# ---------------------------------------------------------------------------
def _patch_merge_kernel(x_ref, wt_ref, wb_ref, cs_ref, b_ref, o_ref):
    # x_ref : (tr, 2, W2, 2C)  model dtype -- row-pair tile of the NHWC view
    # wt_ref: (2C, 2Cout)      gamma-folded weight rows for features [x0|x2]
    # wb_ref: (2C, 2Cout)      gamma-folded weight rows for features [x1|x3]
    # cs_ref: (1, 2Cout) f32   column sums of the full folded weight
    # b_ref : (1, 2Cout) f32   folded bias  beta @ W^T
    # o_ref : (tr*W2, 2Cout)
    tr, _, w2, c2 = x_ref.shape
    t = tr * w2

    x = x_ref[...]
    # Even-h / odd-h halves of each 2x2 patch (vreg selection on a leading
    # dim; the (tr, W2)->(tr*W2) merge is layout-free when W2 % 8 == 0).
    top = x[:, 0, :, :].reshape(t, c2)      # token features [x0 | x2]
    bot = x[:, 1, :, :].reshape(t, c2)      # token features [x1 | x3]

    # One-pass LayerNorm statistics over all 4C features, f32 accumulation.
    tf = top.astype(jnp.float32)
    bf = bot.astype(jnp.float32)
    s1 = jnp.sum(tf, axis=-1, keepdims=True) + jnp.sum(bf, axis=-1, keepdims=True)
    s2 = (jnp.sum(tf * tf, axis=-1, keepdims=True)
          + jnp.sum(bf * bf, axis=-1, keepdims=True))
    inv_n = 1.0 / (2.0 * c2)                # 1 / (4C)
    mean = s1 * inv_n
    var = jnp.maximum(s2 * inv_n - mean * mean, 0.0)
    rstd = lax.rsqrt(var + 1e-5)            # EUP slot

    # Raw-activation MXU matmuls (gamma already folded into the weights);
    # normalization applied in the 2C-wide epilogue.
    acc = jnp.dot(top, wt_ref[...], preferred_element_type=jnp.float32)
    acc = acc + jnp.dot(bot, wb_ref[...], preferred_element_type=jnp.float32)
    out = rstd * (acc - mean * cs_ref[...]) + b_ref[...]
    o_ref[...] = out.astype(o_ref.dtype)


# ---------------------------------------------------------------------------
# Tiling heuristics.
# ---------------------------------------------------------------------------
_HBM_BYTES_PER_STEP = 6 * 1024 * 1024      # amortizes ~0.35us per-step overhead
_VMEM_LIMIT_CAP = 96 * 1024 * 1024
_VMEM_MARGIN = 2 * 1024 * 1024


def _vmem_capacity_bytes():
    try:
        return int(pltpu.get_tpu_info().vmem_capacity_bytes)
    except Exception:
        return 64 * 1024 * 1024            # conservative fallback (v7x physical)


def _choose_row_tile(rp, w2, c2in, c2out, in_isz, out_isz, tile_budget):
    """Row-pair tile size; multiple of 8 whenever the grid has >1 step."""
    if rp <= 8:
        return rp                          # single full block (always legal)
    # Per-row-pair VMEM working set inside one grid step.
    per_rp = w2 * (2 * c2in * in_isz * 2           # input tile, double-buffered
                   + c2out * out_isz * 2            # output tile, double-buffered
                   + (2 * c2in + 3 * c2out) * 4)    # f32 temporaries (stats/acc)
    tr = max(8, int(tile_budget) // per_rp)
    # Target ~6 MB of fresh HBM traffic per grid step.
    hbm_per_rp = w2 * (2 * c2in * in_isz + c2out * out_isz)
    tr = min(tr, max(8, _HBM_BYTES_PER_STEP // hbm_per_rp))
    tr = min(tr, rp)
    tr = max(8, (tr // 8) * 8)             # keep the 2D output block 8-row aligned
    # >= 4 grid steps (>= 2 per TensorCore on dual-core parts) when possible.
    target_steps = min(4, rp // 8)
    while tr > 8 and pl.cdiv(rp, tr) < target_steps:
        tr = max(8, (tr // 2) // 8 * 8)
    return tr


# ---------------------------------------------------------------------------
# pallas_call wrapper.
# ---------------------------------------------------------------------------
def _fused_patch_merge(x_view, w_top, w_bot, colsum, bias):
    """x_view: (RP, 2, W2, 2C) NHWC row-pair view -> (RP*W2, 2Cout) tokens."""
    rp, _, w2, c2in = x_view.shape
    c2out = w_top.shape[1]
    L = rp * w2
    in_isz = x_view.dtype.itemsize
    w_isz = w_top.dtype.itemsize
    out_isz = in_isz

    vmem_cap = _vmem_capacity_bytes()
    vmem_limit = min(vmem_cap * 3 // 5, _VMEM_LIMIT_CAP)   # ~38 MiB v7x, ~76 MiB v5e/v6e
    # Grid-invariant operands stay resident; count them double-buffered.
    # TODO(synk): pipeline_mode=pl.Buffered(1) on the weight/bias specs would
    # reclaim the second copy on VMEM-tight parts.
    resident = 2 * (c2in * c2out * w_isz) * 2 + 2 * (c2out * 4) * 2
    tile_budget = max(1 << 20, vmem_limit - resident - _VMEM_MARGIN)

    tr = _choose_row_tile(rp, w2, c2in, c2out, in_isz, out_isz, tile_budget)
    grid = (pl.cdiv(rp, tr),)

    cost = pl.CostEstimate(
        flops=2 * L * (2 * c2in) * c2out,
        transcendentals=L,
        bytes_accessed=(L * 2 * c2in * in_isz + L * c2out * out_isz
                        + 2 * c2in * c2out * w_isz + 2 * c2out * 4),
    )

    return pl.pallas_call(
        _patch_merge_kernel,
        out_shape=jax.ShapeDtypeStruct((L, c2out), x_view.dtype),
        grid_spec=pltpu.PrefetchScalarGridSpec(
            num_scalar_prefetch=0,
            grid=grid,
            in_specs=[
                pl.BlockSpec((tr, 2, w2, c2in), lambda i: (i, 0, 0, 0)),  # activations
                pl.BlockSpec((c2in, c2out), lambda i: (0, 0)),            # W_top
                pl.BlockSpec((c2in, c2out), lambda i: (0, 0)),            # W_bot
                pl.BlockSpec((1, c2out), lambda i: (0, 0)),               # colsum(Wf)
                pl.BlockSpec((1, c2out), lambda i: (0, 0)),               # folded bias
            ],
            # Lane-dense 2D token output; partial last block masked by Pallas.
            out_specs=pl.BlockSpec((tr * w2, c2out), lambda i: (i, 0)),
        ),
        compiler_params=pltpu.CompilerParams(
            dimension_semantics=("parallel",),
            vmem_limit_bytes=int(vmem_limit),
        ),
        cost_estimate=cost,
    )(x_view, w_top, w_bot, colsum, bias)


# ---------------------------------------------------------------------------
# Parameter folding (call ONCE at init) and forward passes.
# ---------------------------------------------------------------------------
def fold_patch_merging_params(gamma, beta, w_reduction):
    """Fold the LayerNorm affine into the bias-free Linear and pre-split it.

      (xn*gamma + beta) @ W^T == rstd*(x @ Wf - mean*colsum(Wf)) + beta @ W^T
      Wf = (W * gamma)^T, split by the [x0,x1,x2,x3] concat into the rows that
      multiply the even-h features [x0|x2] (top) and odd-h features [x1|x3].
    """
    c4 = w_reduction.shape[1]
    c = c4 // 4
    w32 = w_reduction.astype(jnp.float32)            # (2C, 4C) PyTorch layout
    g32 = gamma.astype(jnp.float32)
    b32 = beta.astype(jnp.float32)
    wf = jnp.transpose(w32 * g32[None, :])           # (4C, 2C), gamma folded
    w_top = jnp.concatenate([wf[0:c], wf[2 * c:3 * c]], axis=0)       # (2C, 2C)
    w_bot = jnp.concatenate([wf[c:2 * c], wf[3 * c:4 * c]], axis=0)   # (2C, 2C)
    colsum = jnp.sum(wf, axis=0, keepdims=True)                        # (1, 2C) f32
    bias = (b32 @ jnp.transpose(w32))[None, :]                         # (1, 2C) f32
    dt = w_reduction.dtype
    return w_top.astype(dt), w_bot.astype(dt), colsum, bias


def patch_merging_nhwc(x_nhwc, w_top, w_bot, colsum, bias):
    """Fused PatchMerging on NHWC activations: (B,H,W,C) -> (B, HW/4, 2C)."""
    B, H, W, C = x_nhwc.shape
    assert H % 2 == 0 and W % 2 == 0
    rp, w2, c2out = B * H // 2, W // 2, w_top.shape[1]
    # Free reshape: split H into row pairs, merge each w-pair's channels.
    x_view = x_nhwc.reshape(rp, 2, w2, 2 * C)
    out = _fused_patch_merge(x_view, w_top, w_bot, colsum, bias)   # (RP*W2, 2C)
    return out.reshape(B, (H // 2) * (W // 2), c2out)


def patch_merging_fused(x_nchw, w_top, w_bot, colsum, bias):
    """PatchMerging forward with pre-folded params.  (B,C,H,W) -> (B,HW/4,2C)."""
    # TODO(synk): if upstream can provide NHWC activations, call
    # patch_merging_nhwc directly and delete this transpose (it is one full
    # extra HBM read+write of the input on this HBM-bound op).
    x_nhwc = jnp.transpose(x_nchw, (0, 2, 3, 1))
    return patch_merging_nhwc(x_nhwc, w_top, w_bot, colsum, bias)


def patch_merging(x_nchw, gamma, beta, w_reduction):
    """Drop-in forward matching the PyTorch module signature."""
    params = fold_patch_merging_params(gamma, beta, w_reduction)
    return patch_merging_fused(x_nchw, *params)


# ---------------------------------------------------------------------------
# Pure-JAX reference replicating the PyTorch forward exactly.
# ---------------------------------------------------------------------------
def _reference(x_nchw, gamma, beta, w_reduction):
    B, C, H, W = x_nchw.shape
    x = jnp.transpose(x_nchw, (0, 2, 3, 1))
    x0 = x[:, 0::2, 0::2, :]
    x1 = x[:, 1::2, 0::2, :]
    x2 = x[:, 0::2, 1::2, :]
    x3 = x[:, 1::2, 1::2, :]
    x = jnp.concatenate([x0, x1, x2, x3], axis=-1).reshape(B, -1, 4 * C)
    mean = jnp.mean(x, axis=-1, keepdims=True)
    var = jnp.mean((x - mean) ** 2, axis=-1, keepdims=True)
    xn = (x - mean) / jnp.sqrt(var + 1e-5)
    xn = xn * gamma + beta
    return jnp.einsum("blk,ok->blo", xn, w_reduction)


if __name__ == "__main__":
    # Small shapes: B=2, C=4 (in_chans), H=W=16  ->  tokens L = 2*8*8 = 128.
    B, C, H, W = 2, 4, 16, 16

    key = jax.random.PRNGKey(0)
    kx, kw, kg, kb = jax.random.split(key, 4)

    x = jax.random.normal(kx, (B, C, H, W), dtype=jnp.float32)
    # nn.Linear(4C, 2C, bias=False) weight: (2C, 4C)
    w_reduction = jax.random.normal(kw, (2 * C, 4 * C), dtype=jnp.float32) * 0.1
    # nn.LayerNorm(4C) affine params.
    gamma = 1.0 + 0.1 * jax.random.normal(kg, (4 * C,), dtype=jnp.float32)
    beta = 0.1 * jax.random.normal(kb, (4 * C,), dtype=jnp.float32)

    params = fold_patch_merging_params(gamma, beta, w_reduction)
    fwd = jax.jit(patch_merging_fused)

    out = jax.block_until_ready(fwd(x, *params))
    ref = jax.block_until_ready(_reference(x, gamma, beta, w_reduction))
    assert out.shape == (B, (H // 2) * (W // 2), 2 * C), out.shape
    err = float(jnp.max(jnp.abs(out - ref)))
    assert jnp.allclose(out, ref, atol=2e-4, rtol=2e-4), err

    # Tail-shape test: RP % tr != 0 exercises Pallas partial-block masking
    # (padding was removed per the performance review).
    B2, H2, W2 = 1, 24, 16
    x_tail = jax.random.normal(kb, (B2, C, H2, W2), dtype=jnp.float32)
    out_t = jax.block_until_ready(fwd(x_tail, *params))
    ref_t = jax.block_until_ready(_reference(x_tail, gamma, beta, w_reduction))
    assert out_t.shape == (B2, (H2 // 2) * (W2 // 2), 2 * C), out_t.shape
    err_t = float(jnp.max(jnp.abs(out_t - ref_t)))
    assert jnp.allclose(out_t, ref_t, atol=2e-4, rtol=2e-4), err_t

    print("KERNEL_OK")
</pallas_src>

<mosaic_0001>
module attributes {stable_mosaic.version = 11 : i64} {
  func.func @_patch_merge_kernel(%arg0: i32, %arg1: memref<8x2x8x8xf32, #tpu.memory_space<vmem>>, %arg2: memref<8x8xf32, #tpu.memory_space<vmem>>, %arg3: memref<8x8xf32, #tpu.memory_space<vmem>>, %arg4: memref<1x8xf32, #tpu.memory_space<vmem>>, %arg5: memref<1x8xf32, #tpu.memory_space<vmem>>, %arg6: memref<64x8xf32, #tpu.memory_space<vmem>>) attributes {dimension_semantics = [#tpu.dimension_semantics<parallel>], iteration_bounds = array<i64: 2>, scalar_prefetch = 0 : i64, scratch_operands = 0 : i64, tpu.core_type = #tpu.core_type<tc>, window_params = [{transform_indices = @transform_0, window_bounds = array<i64: 8, 2, 8, 8>}, {pipeline_mode = #tpu.pipeline_mode<synchronous>, transform_indices = @transform_1, window_bounds = array<i64: 8, 8>}, {pipeline_mode = #tpu.pipeline_mode<synchronous>, transform_indices = @transform_2, window_bounds = array<i64: 8, 8>}, {pipeline_mode = #tpu.pipeline_mode<synchronous>, transform_indices = @transform_3, window_bounds = array<i64: 1, 8>}, {pipeline_mode = #tpu.pipeline_mode<synchronous>, transform_indices = @transform_4, window_bounds = array<i64: 1, 8>}, {transform_indices = @transform_5, window_bounds = array<i64: 64, 8>}]} {
    %c0 = arith.constant 0 : index
    %c0_0 = arith.constant 0 : index
    %c0_1 = arith.constant 0 : index
    %c0_2 = arith.constant 0 : index
    %0 = vector.load %arg1[%c0, %c0_0, %c0_1, %c0_2] : memref<8x2x8x8xf32, #tpu.memory_space<vmem>>, vector<8x2x8x8xf32>
    %1 = vector.extract_strided_slice %0 {offsets = [0, 0, 0, 0], sizes = [8, 1, 8, 8], strides = [1, 1, 1, 1]} : vector<8x2x8x8xf32> to vector<8x1x8x8xf32>
    %2 = vector.shape_cast %1 : vector<8x1x8x8xf32> to vector<8x8x8xf32>
    %3 = vector.shape_cast %2 : vector<8x8x8xf32> to vector<64x8xf32>
    %4 = vector.extract_strided_slice %0 {offsets = [0, 1, 0, 0], sizes = [8, 1, 8, 8], strides = [1, 1, 1, 1]} : vector<8x2x8x8xf32> to vector<8x1x8x8xf32>
    %5 = vector.shape_cast %4 : vector<8x1x8x8xf32> to vector<8x8x8xf32>
    %6 = vector.shape_cast %5 : vector<8x8x8xf32> to vector<64x8xf32>
    %cst = arith.constant dense<0.000000e+00> : vector<64xf32>
    %7 = vector.multi_reduction <add>, %3, %cst [1] : vector<64x8xf32> to vector<64xf32>
    %8 = vector.shape_cast %7 : vector<64xf32> to vector<64x1xf32>
    %cst_3 = arith.constant dense<0.000000e+00> : vector<64xf32>
    %9 = vector.multi_reduction <add>, %6, %cst_3 [1] : vector<64x8xf32> to vector<64xf32>
    %10 = vector.shape_cast %9 : vector<64xf32> to vector<64x1xf32>
    %11 = arith.addf %8, %10 : vector<64x1xf32>
    %12 = arith.mulf %3, %3 : vector<64x8xf32>
    %cst_4 = arith.constant dense<0.000000e+00> : vector<64xf32>
    %13 = vector.multi_reduction <add>, %12, %cst_4 [1] : vector<64x8xf32> to vector<64xf32>
    %14 = vector.shape_cast %13 : vector<64xf32> to vector<64x1xf32>
    %15 = arith.mulf %6, %6 : vector<64x8xf32>
    %cst_5 = arith.constant dense<0.000000e+00> : vector<64xf32>
    %16 = vector.multi_reduction <add>, %15, %cst_5 [1] : vector<64x8xf32> to vector<64xf32>
    %17 = vector.shape_cast %16 : vector<64xf32> to vector<64x1xf32>
    %18 = arith.addf %14, %17 : vector<64x1xf32>
    %cst_6 = arith.constant 6.250000e-02 : f32
    %19 = vector.broadcast %cst_6 : f32 to vector<64x1xf32>
    %20 = arith.mulf %11, %19 : vector<64x1xf32>
    %cst_7 = arith.constant 6.250000e-02 : f32
    %21 = vector.broadcast %cst_7 : f32 to vector<64x1xf32>
    %22 = arith.mulf %18, %21 : vector<64x1xf32>
    %23 = arith.mulf %20, %20 : vector<64x1xf32>
    %24 = arith.subf %22, %23 : vector<64x1xf32>
    %cst_8 = arith.constant 0.000000e+00 : f32
    %25 = vector.broadcast %cst_8 : f32 to vector<64x1xf32>
    %26 = arith.maximumf %24, %25 : vector<64x1xf32>
    %cst_9 = arith.constant 9.99999974E-6 : f32
    %27 = vector.broadcast %cst_9 : f32 to vector<64x1xf32>
    %28 = arith.addf %26, %27 : vector<64x1xf32>
    %29 = math.rsqrt %28 : vector<64x1xf32>
    %c0_10 = arith.constant 0 : index
    %c0_11 = arith.constant 0 : index
    %30 = vector.load %arg2[%c0_10, %c0_11] : memref<8x8xf32, #tpu.memory_space<vmem>>, vector<8x8xf32>
    %cst_12 = arith.constant dense<0.000000e+00> : vector<64x8xf32>
    %31 = tpu.matmul %3, %30, %cst_12 {dimension_numbers = #tpu.dot_dimension_numbers<[1], [0], [0], [1], [0, 0, 1, 1], [], []>} : vector<64x8xf32>, vector<8x8xf32>, vector<64x8xf32> -> vector<64x8xf32>
    %c0_13 = arith.constant 0 : index
    %c0_14 = arith.constant 0 : index
    %32 = vector.load %arg3[%c0_13, %c0_14] : memref<8x8xf32, #tpu.memory_space<vmem>>, vector<8x8xf32>
    %cst_15 = arith.constant dense<0.000000e+00> : vector<64x8xf32>
    %33 = tpu.matmul %6, %32, %cst_15 {dimension_numbers = #tpu.dot_dimension_numbers<[1], [0], [0], [1], [0, 0, 1, 1], [], []>} : vector<64x8xf32>, vector<8x8xf32>, vector<64x8xf32> -> vector<64x8xf32>
    %34 = arith.addf %31, %33 : vector<64x8xf32>
    %c0_16 = arith.constant 0 : index
    %c0_17 = arith.constant 0 : index
    %35 = vector.load %arg4[%c0_16, %c0_17] : memref<1x8xf32, #tpu.memory_space<vmem>>, vector<1x8xf32>
    %36 = vector.broadcast %20 : vector<64x1xf32> to vector<64x8xf32>
    %37 = vector.broadcast %35 : vector<1x8xf32> to vector<64x8xf32>
    %38 = arith.mulf %36, %37 : vector<64x8xf32>
    %39 = arith.subf %34, %38 : vector<64x8xf32>
    %40 = vector.broadcast %29 : vector<64x1xf32> to vector<64x8xf32>
    %41 = arith.mulf %40, %39 : vector<64x8xf32>
    %c0_18 = arith.constant 0 : index
    %c0_19 = arith.constant 0 : index
    %42 = vector.load %arg5[%c0_18, %c0_19] : memref<1x8xf32, #tpu.memory_space<vmem>>, vector<1x8xf32>
    %43 = vector.broadcast %42 : vector<1x8xf32> to vector<64x8xf32>
    %44 = arith.addf %41, %43 : vector<64x8xf32>
    %c0_20 = arith.constant 0 : index
    %c0_21 = arith.constant 0 : index
    %45 = vector.load %arg6[%c0_20, %c0_21] : memref<64x8xf32, #tpu.memory_space<vmem>>, vector<64x8xf32>
    tpu.vector_store %arg6[%c0_20, %c0_21], %44 {strides = array<i32>} : memref<64x8xf32, #tpu.memory_space<vmem>>, vector<64x8xf32>,
    return
  }
  func.func @transform_0(%arg0: i32) -> (i32, i32, i32, i32) {
    %c0_i32 = arith.constant 0 : i32
    %c0_i32_0 = arith.constant 0 : i32
    %c0_i32_1 = arith.constant 0 : i32
    %c0_i32_2 = arith.constant 0 : i32
    return %arg0, %c0_i32, %c0_i32_0, %c0_i32_1 : i32, i32, i32, i32
  }
  func.func @transform_1(%arg0: i32) -> (i32, i32) {
    %c0_i32 = arith.constant 0 : i32
    %c0_i32_0 = arith.constant 0 : i32
    %c0_i32_1 = arith.constant 0 : i32
    return %c0_i32, %c0_i32_0 : i32, i32
  }
  func.func @transform_2(%arg0: i32) -> (i32, i32) {
    %c0_i32 = arith.constant 0 : i32
    %c0_i32_0 = arith.constant 0 : i32
    %c0_i32_1 = arith.constant 0 : i32
    return %c0_i32, %c0_i32_0 : i32, i32
  }
  func.func @transform_3(%arg0: i32) -> (i32, i32) {
    %c0_i32 = arith.constant 0 : i32
    %c0_i32_0 = arith.constant 0 : i32
    %c0_i32_1 = arith.constant 0 : i32
    return %c0_i32, %c0_i32_0 : i32, i32
  }
  func.func @transform_4(%arg0: i32) -> (i32, i32) {
    %c0_i32 = arith.constant 0 : i32
    %c0_i32_0 = arith.constant 0 : i32
    %c0_i32_1 = arith.constant 0 : i32
    return %c0_i32, %c0_i32_0 : i32, i32
  }
  func.func @transform_5(%arg0: i32) -> (i32, i32) {
    %c0_i32 = arith.constant 0 : i32
    %c0_i32_0 = arith.constant 0 : i32
    return %arg0, %c0_i32 : i32, i32
  }
}

</mosaic_0001>

<llo_original>
// kernel: patch_merging_fused.1
$region0: #{patch_merging_fused.1}
  #allocation0 [shape = 'u32[]', space=smem, size = 0x4, offset = 0x4, fixed_abs, tag = 'smem constant byte address 0x4 - core index']
  #allocation1 [shape = 'u32[144,128]{1,0:T(1,128)}', space=vmem, size = 0x12000, scoped, tag = 'internal scratch']
  %s0 = inlined_call_operand.vmem [shape: f32[16,2,8,8], index: 0, kind: input, shape index: {}]
  %s1 = inlined_call_operand.vmem [shape: f32[8,8], index: 1, kind: input, shape index: {}]
  %s2 = inlined_call_operand.vmem [shape: f32[8,8], index: 2, kind: input, shape index: {}]
  %s3 = inlined_call_operand.vmem [shape: f32[1,8], index: 3, kind: input, shape index: {}]
  %s4 = inlined_call_operand.vmem [shape: f32[1,8], index: 4, kind: input, shape index: {}]
  %s5 = inlined_call_operand.vmem [shape: f32[128,8], index: 5, kind: output, shape index: {}]
  %s6 = sld [smem:[#allocation0]]
  $region53: #{patch_merging_fused.1} parent=0
    _
  %s8 = ssub.s32 1, %s6
  %s9 = scalar_select 0, %s8, %s6
  loop: start=0, step=1, limit=4
  $region2: #{patch_merging_fused.1} parent=0 // loop_pre_header
    _
  $region3: #{patch_merging_fused.1} parent=0 // loop_header
    %s11 = sphi 0, %s15
    %p12 = scmp.ge.s32.totalorder %s11, 4
    %s21 = sphi 0, %s23
    %s24 = sphi 0, %s21
    %s25 = sphi 0, %s24
    %s41 = sphi 0, %s25
    %s45 = sphi 0, %s45
    %s47 = sphi 0, %s45
    %s48 = sphi 0, %s47
    %s62 = sphi 0, %s48
    %s66 = sphi 0, %s66
    %s68 = sphi 0, %s66
    %s69 = sphi 0, %s68
    %s83 = sphi 0, %s69
    %s87 = sphi 0, %s87
    %s89 = sphi 0, %s87
    %s90 = sphi 0, %s89
    %s104 = sphi 0, %s90
    %s108 = sphi 0, %s108
    %s110 = sphi 0, %s108
    %s111 = sphi 0, %s110
    %s125 = sphi 0, %s111
    %s131 = sphi 0, %s133
    %s134 = sphi 0, %s131
    %s135 = sphi 0, %s134
    %s151 = sphi 0, %s135
  $region4: #{patch_merging_fused.1} parent=0 // loop_header_branch
    %14 = sbr.rel (%p12) target = $region8
  $region5: #{patch_merging_fused.1} parent=0 // loop_body
    %s16 = ssub.s32 %s11, 1
    %s17 = ssub.s32 %s11, 2
    %s18 = sadd.s32 %s11, 1
    %s19 = ssub.s32 %s11, %s18
    %p20 = scmp.eq.s32.totalorder %s19, 0
    %s22 = sadd.s32 %s21, 1
    %s23 = scalar_select %p20, %s21, %s22
    %p26 = pneg %p20
    %p27 = scmp.eq.s32.totalorder %s11, 1
    %p28 = por %p26, %p27
    %p29 = scmp.ne.s32.totalorder %s21, %s24
    %p30 = scmp.eq.s32.totalorder %s11, 0
    %p31 = por %p29, %p30
    %p32 = scmp.ne.s32.totalorder %s21, %s24
    %p33 = scmp.eq.s32.totalorder %s16, 1
    %p34 = por %p32, %p33
    %p35 = scmp.ne.s32.totalorder %s24, %s25
    %p36 = scmp.eq.s32.totalorder %s16, 0
    %p37 = por %p35, %p36
    %p38 = scmp.ne.s32.totalorder %s24, %s25
    %p39 = scmp.eq.s32.totalorder %s17, 1
    %p40 = por %p38, %p39
    %p42 = scmp.ne.s32.totalorder %s25, %s41
    %p43 = scmp.eq.s32.totalorder %s17, 0
    %p44 = por %p42, %p43
    %s46 = sadd.s32 %s45, 1
    %p49 = scmp.eq.s32.totalorder %s11, 1
    %p50 = scmp.ne.s32.totalorder %s45, %s47
    %p51 = scmp.eq.s32.totalorder %s11, 0
    %p52 = por %p50, %p51
    %p53 = scmp.ne.s32.totalorder %s45, %s47
    %p54 = scmp.eq.s32.totalorder %s16, 1
    %p55 = por %p53, %p54
    %p56 = scmp.ne.s32.totalorder %s47, %s48
    %p57 = scmp.eq.s32.totalorder %s16, 0
    %p58 = por %p56, %p57
    %p59 = scmp.ne.s32.totalorder %s47, %s48
    %p60 = scmp.eq.s32.totalorder %s17, 1
    %p61 = por %p59, %p60
    %p63 = scmp.ne.s32.totalorder %s48, %s62
    %p64 = scmp.eq.s32.totalorder %s17, 0
    %p65 = por %p63, %p64
    %s67 = sadd.s32 %s66, 1
    %p70 = scmp.eq.s32.totalorder %s11, 1
    %p71 = scmp.ne.s32.totalorder %s66, %s68
    %p72 = scmp.eq.s32.totalorder %s11, 0
    %p73 = por %p71, %p72
    %p74 = scmp.ne.s32.totalorder %s66, %s68
    %p75 = scmp.eq.s32.totalorder %s16, 1
    %p76 = por %p74, %p75
    %p77 = scmp.ne.s32.totalorder %s68, %s69
    %p78 = scmp.eq.s32.totalorder %s16, 0
    %p79 = por %p77, %p78
    %p80 = scmp.ne.s32.totalorder %s68, %s69
    %p81 = scmp.eq.s32.totalorder %s17, 1
    %p82 = por %p80, %p81
    %p84 = scmp.ne.s32.totalorder %s69, %s83
    %p85 = scmp.eq.s32.totalorder %s17, 0
    %p86 = por %p84, %p85
    %s88 = sadd.s32 %s87, 1
    %p91 = scmp.eq.s32.totalorder %s11, 1
    %p92 = scmp.ne.s32.totalorder %s87, %s89
    %p93 = scmp.eq.s32.totalorder %s11, 0
    %p94 = por %p92, %p93
    %p95 = scmp.ne.s32.totalorder %s87, %s89
    %p96 = scmp.eq.s32.totalorder %s16, 1
    %p97 = por %p95, %p96
    %p98 = scmp.ne.s32.totalorder %s89, %s90
    %p99 = scmp.eq.s32.totalorder %s16, 0
    %p100 = por %p98, %p99
    %p101 = scmp.ne.s32.totalorder %s89, %s90
    %p102 = scmp.eq.s32.totalorder %s17, 1
    %p103 = por %p101, %p102
    %p105 = scmp.ne.s32.totalorder %s90, %s104
    %p106 = scmp.eq.s32.totalorder %s17, 0
    %p107 = por %p105, %p106
    %s109 = sadd.s32 %s108, 1
    %p112 = scmp.eq.s32.totalorder %s11, 1
    %p113 = scmp.ne.s32.totalorder %s108, %s110
    %p114 = scmp.eq.s32.totalorder %s11, 0
    %p115 = por %p113, %p114
    %p116 = scmp.ne.s32.totalorder %s108, %s110
    %p117 = scmp.eq.s32.totalorder %s16, 1
    %p118 = por %p116, %p117
    %p119 = scmp.ne.s32.totalorder %s110, %s111
    %p120 = scmp.eq.s32.totalorder %s16, 0
    %p121 = por %p119, %p120
    %p122 = scmp.ne.s32.totalorder %s110, %s111
    %p123 = scmp.eq.s32.totalorder %s17, 1
    %p124 = por %p122, %p123
    %p126 = scmp.ne.s32.totalorder %s111, %s125
    %p127 = scmp.eq.s32.totalorder %s17, 0
    %p128 = por %p126, %p127
    %s129 = ssub.s32 %s11, %s18
    %p130 = scmp.eq.s32.totalorder %s129, 0
    %s132 = sadd.s32 %s131, 1
    %s133 = scalar_select %p130, %s131, %s132
    %p136 = pneg %p130
    %p137 = scmp.eq.s32.totalorder %s11, 1
    %p138 = por %p136, %p137
    %p139 = scmp.ne.s32.totalorder %s131, %s134
    %p140 = scmp.eq.s32.totalorder %s11, 0
    %p141 = por %p139, %p140
    %p142 = scmp.ne.s32.totalorder %s131, %s134
    %p143 = scmp.eq.s32.totalorder %s16, 1
    %p144 = por %p142, %p143
    %p145 = scmp.ne.s32.totalorder %s134, %s135
    %p146 = scmp.eq.s32.totalorder %s16, 0
    %p147 = por %p145, %p146
    %p148 = scmp.ne.s32.totalorder %s134, %s135
    %p149 = scmp.eq.s32.totalorder %s17, 1
    %p150 = por %p148, %p149
    %p152 = scmp.ne.s32.totalorder %s135, %s151
    %p153 = scmp.eq.s32.totalorder %s17, 0
    %p154 = por %p152, %p153
    %p155 = scmp.le.s32.totalorder 1, %s11
    %p156 = scmp.lt.s32.totalorder %s11, 3
    %p157 = pnand %p155, %p156
    %p158 = pneg %p157
    // Predicated region
    $region9: #{patch_merging_fused.1} parent=5 // pred_check
      _
    $region10: #{patch_merging_fused.1} parent=5 // pred_check_branch
      %160 = sbr.rel (%p157) target = $region12
    $region11: #{patch_merging_fused.1} parent=5 // pred_region
      %s161 = ssub.s32 %s11, 1
      // Predicated region
      $region13: #{patch_merging_fused.1} parent=11 // pred_check
        %p162 = pneg %p58
      $region14: #{patch_merging_fused.1} parent=11 // pred_check_branch
        %164 = sbr.rel (%p162) target = $region16
      $region15: #{patch_merging_fused.1} parent=11 // pred_region
        _
      $region16: #{patch_merging_fused.1} parent=11 // pred_fallthru
        _
      // Predicated region
      $region17: #{patch_merging_fused.1} parent=11 // pred_check
        %p165 = pneg %p79
      $region18: #{patch_merging_fused.1} parent=11 // pred_check_branch
        %167 = sbr.rel (%p165) target = $region20
      $region19: #{patch_merging_fused.1} parent=11 // pred_region
        _
      $region20: #{patch_merging_fused.1} parent=11 // pred_fallthru
        _
      // Predicated region
      $region21: #{patch_merging_fused.1} parent=11 // pred_check
        %p168 = pneg %p100
      $region22: #{patch_merging_fused.1} parent=11 // pred_check_branch
        %170 = sbr.rel (%p168) target = $region24
      $region23: #{patch_merging_fused.1} parent=11 // pred_region
        _
      $region24: #{patch_merging_fused.1} parent=11 // pred_fallthru
        _
      // Predicated region
      $region25: #{patch_merging_fused.1} parent=11 // pred_check
        %p171 = pneg %p121
      $region26: #{patch_merging_fused.1} parent=11 // pred_check_branch
        %173 = sbr.rel (%p171) target = $region28
      $region27: #{patch_merging_fused.1} parent=11 // pred_region
        _
      $region28: #{patch_merging_fused.1} parent=11 // pred_fallthru
        _
    $region12: #{patch_merging_fused.1} parent=5 // pred_fallthru
      _
    %p174 = scmp.lt.s32.totalorder %s11, 2
    // Predicated region
    $region29: #{patch_merging_fused.1} parent=5 // pred_check
      %p175 = pneg %p174
    $region30: #{patch_merging_fused.1} parent=5 // pred_check_branch
      %177 = sbr.rel (%p175) target = $region32
    $region31: #{patch_merging_fused.1} parent=5 // pred_region
      // Predicated region
      $region33: #{patch_merging_fused.1} parent=31 // pred_check
        %p178 = pneg %p31
      $region34: #{patch_merging_fused.1} parent=31 // pred_check_branch
        %180 = sbr.rel (%p178) target = $region36
      $region35: #{patch_merging_fused.1} parent=31 // pred_region
        %s181 = smul.u32 8, %s11
        %p182 = scmp.lt.s32.totalorder %s181, 15
        %s183 = scalar_select %p182, %s181, 15
        %s184 = smul.addr %s183, 2
        %s185 = smul.addr %s184, 8
        %s186 = scalar_lea.vmem %s0, %s185
        %s187 = smul.u32 8, %s11
      $region36: #{patch_merging_fused.1} parent=31 // pred_fallthru
        _
    $region32: #{patch_merging_fused.1} parent=5 // pred_fallthru
      _
    %p188 = scmp.le.s32.totalorder 1, %s11
    %p189 = scmp.lt.s32.totalorder %s11, 3
    %p190 = pnand %p188, %p189
    %p191 = pneg %p190
    // Predicated region
    $region37: #{patch_merging_fused.1} parent=5 // pred_check
      _
    $region38: #{patch_merging_fused.1} parent=5 // pred_check_branch
      %193 = sbr.rel (%p190) target = $region40
    $region39: #{patch_merging_fused.1} parent=5 // pred_region
      %s194 = ssub.s32 %s11, 1
      %s195 = smul.u32 8, %s16
      %p196 = scmp.lt.s32.totalorder %s195, 15
      %s197 = scalar_select %p196, %s195, 15
      %s198 = smul.addr %s197, 2
      %s199 = smul.addr %s198, 8
      %s200 = scalar_lea.vmem %s0, %s199
      %p201 = pneg %p37
      %p202 = pneg %p34
      %p203 = pneg %p58
      %p204 = pneg %p55
      %p205 = pneg %p79
      %p206 = pneg %p76
      %p207 = pneg %p100
      %p208 = pneg %p97
      %p209 = pneg %p121
      %p210 = pneg %p118
      %p211 = pneg %p147
      %p212 = pneg %p144
      %s213 = smul.u32 8, %s16
      %p214 = scmp.lt.s32.totalorder %s213, 15
      %s215 = scalar_select %p214, %s213, 15
      %s216 = smul.addr %s215, 8
      %s217 = scalar_lea.vmem %s5, %s216
      %s218 = smul.u32 8, %s16
      %p219 = scmp.lt.s32.totalorder %s218, 15
      %s220 = scalar_select %p219, %s218, 15
      %s221 = smul.addr %s220, 2
      %s222 = smul.addr %s221, 8
      %s223 = scalar_lea.vmem %s0, %s222
      %s224 = smul.u32 8, %s16
      %s225 = smul.u32 8, %s16
      %p226 = scmp.lt.s32.totalorder %s225, 15
      %s227 = scalar_select %p226, %s225, 15
      %s228 = smul.addr %s227, 8
      %s229 = scalar_lea.vmem %s5, %s228
      %s230 = smul.u32 8, %s16
      %v231 = vld [vmem:[%s223] sm:$0xff]
      %v232 = vld [vmem:[%s223 + $0x8] sm:$0xff]
      %v233 = vld [vmem:[%s223 + $0x10] sm:$0xff]
      %v234 = vld [vmem:[%s223 + $0x18] sm:$0xff]
      %v235 = vld [vmem:[%s223 + $0x20] sm:$0xff]
      %v236 = vld [vmem:[%s223 + $0x28] sm:$0xff]
      %v237 = vld [vmem:[%s223 + $0x30] sm:$0xff]
      %v238 = vld [vmem:[%s223 + $0x38] sm:$0xff]
      %v239 = vld [vmem:[%s223 + $0x40] sm:$0xff]
      %v240 = vld [vmem:[%s223 + $0x48] sm:$0xff]
      %v241 = vld [vmem:[%s223 + $0x50] sm:$0xff]
      %v242 = vld [vmem:[%s223 + $0x58] sm:$0xff]
      %v243 = vld [vmem:[%s223 + $0x60] sm:$0xff]
      %v244 = vld [vmem:[%s223 + $0x68] sm:$0xff]
      %v245 = vld [vmem:[%s223 + $0x70] sm:$0xff]
      %v246 = vld [vmem:[%s223 + $0x78] sm:$0xff]
      %vm247 = vcmask 64512
      %v248 = vsel %vm247, %v231, 0.0
      %249 = vadd.xlane.f32.xlu0 %v248
      %v250 = vpop.xlane.xlu0 %249
      %v251 = vsel %vm247, %v233, 0.0
      %252 = vadd.xlane.f32.xlu0 %v251
      %v253 = vpop.xlane.xlu0 %252
      %v254 = vsel %vm247, %v235, 0.0
      %255 = vadd.xlane.f32.xlu0 %v254
      %v256 = vpop.xlane.xlu0 %255
      %v257 = vsel %vm247, %v237, 0.0
      %258 = vadd.xlane.f32.xlu0 %v257
      %v259 = vpop.xlane.xlu0 %258
      %v260 = vsel %vm247, %v239, 0.0
      %261 = vadd.xlane.f32.xlu0 %v260
      %v262 = vpop.xlane.xlu0 %261
      %v263 = vsel %vm247, %v241, 0.0
      %264 = vadd.xlane.f32.xlu0 %v263
      %v265 = vpop.xlane.xlu0 %264
      %v266 = vsel %vm247, %v243, 0.0
      %267 = vadd.xlane.f32.xlu0 %v266
      %v268 = vpop.xlane.xlu0 %267
      %v269 = vsel %vm247, %v245, 0.0
      %270 = vadd.xlane.f32.xlu0 %v269
      %v271 = vpop.xlane.xlu0 %270
      %v272 = vsel %vm247, %v232, 0.0
      %273 = vadd.xlane.f32.xlu0 %v272
      %v274 = vpop.xlane.xlu0 %273
      %v275 = vsel %vm247, %v234, 0.0
      %276 = vadd.xlane.f32.xlu0 %v275
      %v277 = vpop.xlane.xlu0 %276
      %v278 = vsel %vm247, %v236, 0.0
      %279 = vadd.xlane.f32.xlu0 %v278
      %v280 = vpop.xlane.xlu0 %279
      %v281 = vsel %vm247, %v238, 0.0
      %282 = vadd.xlane.f32.xlu0 %v281
      %v283 = vpop.xlane.xlu0 %282
      %v284 = vsel %vm247, %v240, 0.0
      %285 = vadd.xlane.f32.xlu0 %v284
      %v286 = vpop.xlane.xlu0 %285
      %v287 = vsel %vm247, %v242, 0.0
      %288 = vadd.xlane.f32.xlu0 %v287
      %v289 = vpop.xlane.xlu0 %288
      %v290 = vsel %vm247, %v244, 0.0
      %291 = vadd.xlane.f32.xlu0 %v290
      %v292 = vpop.xlane.xlu0 %291
      %v293 = vsel %vm247, %v246, 0.0
      %294 = vadd.xlane.f32.xlu0 %v293
      %v295 = vpop.xlane.xlu0 %294
      %v296 = vadd.f32 %v250, %v274
      %v297 = vadd.f32 %v253, %v277
      %v298 = vadd.f32 %v256, %v280
      %v299 = vadd.f32 %v259, %v283
      %v300 = vadd.f32 %v262, %v286
      %v301 = vadd.f32 %v265, %v289
      %v302 = vadd.f32 %v268, %v292
      %v303 = vadd.f32 %v271, %v295
      %v304 = vmul.f32 %v231, %v231
      %v305 = vmul.f32 %v233, %v233
      %v306 = vmul.f32 %v235, %v235
      %v307 = vmul.f32 %v237, %v237
      %v308 = vmul.f32 %v239, %v239
      %v309 = vmul.f32 %v241, %v241
      %v310 = vmul.f32 %v243, %v243
      %v311 = vmul.f32 %v245, %v245
      %v312 = vsel %vm247, %v304, 0.0
      %313 = vadd.xlane.f32.xlu0 %v312
      %v314 = vpop.xlane.xlu0 %313
      %v315 = vsel %vm247, %v305, 0.0
      %316 = vadd.xlane.f32.xlu0 %v315
      %v317 = vpop.xlane.xlu0 %316
      %v318 = vsel %vm247, %v306, 0.0
      %319 = vadd.xlane.f32.xlu0 %v318
      %v320 = vpop.xlane.xlu0 %319
      %v321 = vsel %vm247, %v307, 0.0
      %322 = vadd.xlane.f32.xlu0 %v321
      %v323 = vpop.xlane.xlu0 %322
      %v324 = vsel %vm247, %v308, 0.0
      %325 = vadd.xlane.f32.xlu0 %v324
      %v326 = vpop.xlane.xlu0 %325
      %v327 = vsel %vm247, %v309, 0.0
      %328 = vadd.xlane.f32.xlu0 %v327
      %v329 = vpop.xlane.xlu0 %328
      %v330 = vsel %vm247, %v310, 0.0
      %331 = vadd.xlane.f32.xlu0 %v330
      %v332 = vpop.xlane.xlu0 %331
      %v333 = vsel %vm247, %v311, 0.0
      %334 = vadd.xlane.f32.xlu0 %v333
      %v335 = vpop.xlane.xlu0 %334
      %v336 = vmul.f32 %v232, %v232
      %v337 = vmul.f32 %v234, %v234
      %v338 = vmul.f32 %v236, %v236
      %v339 = vmul.f32 %v238, %v238
      %v340 = vmul.f32 %v240, %v240
      %v341 = vmul.f32 %v242, %v242
      %v342 = vmul.f32 %v244, %v244
      %v343 = vmul.f32 %v246, %v246
      %v344 = vsel %vm247, %v336, 0.0
      %345 = vadd.xlane.f32.xlu0 %v344
      %v346 = vpop.xlane.xlu0 %345
      %v347 = vsel %vm247, %v337, 0.0
      %348 = vadd.xlane.f32.xlu0 %v347
      %v349 = vpop.xlane.xlu0 %348
      %v350 = vsel %vm247, %v338, 0.0
      %351 = vadd.xlane.f32.xlu0 %v350
      %v352 = vpop.xlane.xlu0 %351
      %v353 = vsel %vm247, %v339, 0.0
      %354 = vadd.xlane.f32.xlu0 %v353
      %v355 = vpop.xlane.xlu0 %354
      %v356 = vsel %vm247, %v340, 0.0
      %357 = vadd.xlane.f32.xlu0 %v356
      %v358 = vpop.xlane.xlu0 %357
      %v359 = vsel %vm247, %v341, 0.0
      %360 = vadd.xlane.f32.xlu0 %v359
      %v361 = vpop.xlane.xlu0 %360
      %v362 = vsel %vm247, %v342, 0.0
      %363 = vadd.xlane.f32.xlu0 %v362
      %v364 = vpop.xlane.xlu0 %363
      %v365 = vsel %vm247, %v343, 0.0
      %366 = vadd.xlane.f32.xlu0 %v365
      %v367 = vpop.xlane.xlu0 %366
      %v368 = vadd.f32 %v314, %v346
      %v369 = vadd.f32 %v317, %v349
      %v370 = vadd.f32 %v320, %v352
      %v371 = vadd.f32 %v323, %v355
      %v372 = vadd.f32 %v326, %v358
      %v373 = vadd.f32 %v329, %v361
      %v374 = vadd.f32 %v332, %v364
      %v375 = vadd.f32 %v335, %v367
      %v376 = vmul.f32 %v296, 0.0625
      %v377 = vmul.f32 %v297, 0.0625
      %v378 = vmul.f32 %v298, 0.0625
      %v379 = vmul.f32 %v299, 0.0625
      %v380 = vmul.f32 %v300, 0.0625
      %v381 = vmul.f32 %v301, 0.0625
      %v382 = vmul.f32 %v302, 0.0625
      %v383 = vmul.f32 %v303, 0.0625
      %v384 = vmul.f32 %v368, 0.0625
      %v385 = vmul.f32 %v369, 0.0625
      %v386 = vmul.f32 %v370, 0.0625
      %v387 = vmul.f32 %v371, 0.0625
      %v388 = vmul.f32 %v372, 0.0625
      %v389 = vmul.f32 %v373, 0.0625
      %v390 = vmul.f32 %v374, 0.0625
      %v391 = vmul.f32 %v375, 0.0625
      %v392 = vmul.f32 %v376, %v376
      %v393 = vmul.f32 %v377, %v377
      %v394 = vmul.f32 %v378, %v378
      %v395 = vmul.f32 %v379, %v379
      %v396 = vmul.f32 %v380, %v380
      %v397 = vmul.f32 %v381, %v381
      %v398 = vmul.f32 %v382, %v382
      %v399 = vmul.f32 %v383, %v383
      %v400 = vsub.f32 %v384, %v392
      %v401 = vsub.f32 %v385, %v393
      %v402 = vsub.f32 %v386, %v394
      %v403 = vsub.f32 %v387, %v395
      %v404 = vsub.f32 %v388, %v396
      %v405 = vsub.f32 %v389, %v397
      %v406 = vsub.f32 %v390, %v398
      %v407 = vsub.f32 %v391, %v399
      %v408 = vmax.f32 %v400, 0.0
      %v409 = vmax.f32 %v401, 0.0
      %v410 = vmax.f32 %v402, 0.0
      %v411 = vmax.f32 %v403, 0.0
      %v412 = vmax.f32 %v404, 0.0
      %v413 = vmax.f32 %v405, 0.0
      %v414 = vmax.f32 %v406, 0.0
      %v415 = vmax.f32 %v407, 0.0
      %v416 = vadd.f32 %v408, 1e-05
      %v417 = vadd.f32 %v409, 1e-05
      %v418 = vadd.f32 %v410, 1e-05
      %v419 = vadd.f32 %v411, 1e-05
      %v420 = vadd.f32 %v412, 1e-05
      %v421 = vadd.f32 %v413, 1e-05
      %v422 = vadd.f32 %v414, 1e-05
      %v423 = vadd.f32 %v415, 1e-05
      %v424 = vrsqrt.pop %v416
      %v425 = vrsqrt.pop %v417
      %v426 = vrsqrt.pop %v418
      %v427 = vrsqrt.pop %v419
      %v428 = vrsqrt.pop %v420
      %v429 = vrsqrt.pop %v421
      %v430 = vrsqrt.pop %v422
      %v431 = vrsqrt.pop %v423
      %v432 = vld [vmem:[%s1] sm:$0xff]
      %v433 = vld [vmem:[%s2] sm:$0xff]
      %v435 = vsel %vm247, %v232, 0
      %v438 = vsel %vm247, %v234, 0
      %v441 = vsel %vm247, %v236, 0
      %v444 = vsel %vm247, %v238, 0
      %v447 = vsel %vm247, %v240, 0
      %v450 = vsel %vm247, %v242, 0
      %v453 = vsel %vm247, %v244, 0
      %v456 = vsel %vm247, %v246, 0
      %458 = vmatprep.subr.mxu0 0.0
      %459 = vmatpush1.msra.mxu0 0.0
      %460 = vmatprep.subr.mxu0 0.0
      %461 = vmatpush1.msra.mxu0 0.0
      %462 = vmatprep.subr.mxu0 0.0
      %463 = vmatpush1.msra.mxu0 0.0
      %464 = vmatprep.subr.mxu0 0.0
      %465 = vmatpush1.msra.mxu0 0.0
      %466 = vmatprep.subr.mxu0 0.0
      %467 = vmatpush1.msra.mxu0 0.0
      %468 = vmatprep.subr.mxu0 0.0
      %469 = vmatpush1.msra.mxu0 0.0
      %470 = vmatprep.subr.mxu0 0.0
      %471 = vmatpush1.msra.mxu0 0.0
      %472 = vmatprep.subr.mxu0 0.0
      %473 = vmatpush1.msra.mxu0 0.0
      %474 = vmatprep.subr.mxu0 0.0
      %475 = vmatpush1.msra.mxu0 0.0
      %476 = vmatprep.subr.mxu0 0.0
      %477 = vmatpush1.msra.mxu0 0.0
      %478 = vmatprep.subr.mxu0 0.0
      %479 = vmatpush1.msra.mxu0 0.0
      %480 = vmatprep.subr.mxu0 0.0
      %481 = vmatpush1.msra.mxu0 0.0
      %482 = vmatprep.subr.mxu0 0.0
      %483 = vmatpush1.msra.mxu0 0.0
      %484 = vmatprep.subr.mxu0 0.0
      %485 = vmatpush1.msra.mxu0 0.0
      %486 = vmatprep.subr.mxu0 0.0
      %487 = vmatpush1.msra.mxu0 0.0
      %488 = vmatprep.subr.mxu0 0.0
      %489 = vmatpush1.msra.mxu0 %v433
      %490 = vmatprep.subr.mxu0 0.0
      %491 = vmatpush2.msra.mxu0 0.0
      %492 = vmatprep.subr.mxu0 0.0
      %493 = vmatpush2.msra.mxu0 0.0
      %494 = vmatprep.subr.mxu0 0.0
      %495 = vmatpush2.msra.mxu0 0.0
      %496 = vmatprep.subr.mxu0 0.0
      %497 = vmatpush2.msra.mxu0 0.0
      %498 = vmatprep.subr.mxu0 0.0
      %499 = vmatpush2.msra.mxu0 0.0
      %500 = vmatprep.subr.mxu0 0.0
      %501 = vmatpush2.msra.mxu0 0.0
      %502 = vmatprep.subr.mxu0 0.0
      %503 = vmatpush2.msra.mxu0 0.0
      %504 = vmatprep.subr.mxu0 0.0
      %505 = vmatpush2.msra.mxu0 0.0
      %506 = vmatprep.subr.mxu0 0.0
      %507 = vmatpush2.msra.mxu0 0.0
      %508 = vmatprep.subr.mxu0 0.0
      %509 = vmatpush2.msra.mxu0 0.0
      %510 = vmatprep.subr.mxu0 0.0
      %511 = vmatpush2.msra.mxu0 0.0
      %512 = vmatprep.subr.mxu0 0.0
      %513 = vmatpush2.msra.mxu0 0.0
      %514 = vmatprep.subr.mxu0 0.0
      %515 = vmatpush2.msra.mxu0 0.0
      %516 = vmatprep.subr.mxu0 0.0
      %517 = vmatpush2.msra.mxu0 0.0
      %518 = vmatprep.subr.mxu0 0.0
      %519 = vmatpush2.msra.mxu0 0.0
      %520 = vmatprep.subr.mxu0 0.0
      %521 = vmatpush2.msra.mxu0 0.0
      %522 = vmatprep.mubr.f32.mxu0 0.0
      %523 = vmatmul.mubr.f32.gmra.mxu0 %v435
      %v524 = vpop.f32.mrf.mxu0
      %v525 = vadd.f32 0.0, %v524
      %v526 = vpop.f32.mrf.mxu0
      %527 = vmatprep.mubr.f32.mxu0 0.0
      %528 = vmatmul.mubr.f32.gmra.mxu0 %v438
      %v529 = vpop.f32.mrf.mxu0
      %v530 = vadd.f32 0.0, %v529
      %v531 = vpop.f32.mrf.mxu0
      %532 = vmatprep.mubr.f32.mxu0 0.0
      %533 = vmatmul.mubr.f32.gmra.mxu0 %v441
      %v534 = vpop.f32.mrf.mxu0
      %v535 = vadd.f32 0.0, %v534
      %v536 = vpop.f32.mrf.mxu0
      %537 = vmatprep.mubr.f32.mxu0 0.0
      %538 = vmatmul.mubr.f32.gmra.mxu0 %v444
      %v539 = vpop.f32.mrf.mxu0
      %v540 = vadd.f32 0.0, %v539
      %v541 = vpop.f32.mrf.mxu0
      %542 = vmatprep.mubr.f32.mxu0 0.0
      %543 = vmatmul.mubr.f32.gmra.mxu0 %v447
      %v544 = vpop.f32.mrf.mxu0
      %v545 = vadd.f32 0.0, %v544
      %v546 = vpop.f32.mrf.mxu0
      %547 = vmatprep.mubr.f32.mxu0 0.0
      %548 = vmatmul.mubr.f32.gmra.mxu0 %v450
      %v549 = vpop.f32.mrf.mxu0
      %v550 = vadd.f32 0.0, %v549
      %v551 = vpop.f32.mrf.mxu0
      %552 = vmatprep.mubr.f32.mxu0 0.0
      %553 = vmatmul.mubr.f32.gmra.mxu0 %v453
      %v554 = vpop.f32.mrf.mxu0
      %v555 = vadd.f32 0.0, %v554
      %v556 = vpop.f32.mrf.mxu0
      %557 = vmatprep.mubr.f32.mxu0 0.0
      %558 = vmatmul.mubr.f32.gmra.mxu0 %v456
      %v559 = vpop.f32.mrf.mxu0
      %v560 = vadd.f32 0.0, %v559
      %v561 = vpop.f32.mrf.mxu0
      %562 = vdwg.mxu0
      %v564 = vsel %vm247, %v231, 0
      %v567 = vsel %vm247, %v233, 0
      %v570 = vsel %vm247, %v235, 0
      %v573 = vsel %vm247, %v237, 0
      %v576 = vsel %vm247, %v239, 0
      %v579 = vsel %vm247, %v241, 0
      %v582 = vsel %vm247, %v243, 0
      %v585 = vsel %vm247, %v245, 0
      %587 = vmatprep.subr.mxu0 0.0
      %588 = vmatpush1.msra.mxu0 0.0
      %589 = vmatprep.subr.mxu0 0.0
      %590 = vmatpush1.msra.mxu0 0.0
      %591 = vmatprep.subr.mxu0 0.0
      %592 = vmatpush1.msra.mxu0 0.0
      %593 = vmatprep.subr.mxu0 0.0
      %594 = vmatpush1.msra.mxu0 0.0
      %595 = vmatprep.subr.mxu0 0.0
      %596 = vmatpush1.msra.mxu0 0.0
      %597 = vmatprep.subr.mxu0 0.0
      %598 = vmatpush1.msra.mxu0 0.0
      %599 = vmatprep.subr.mxu0 0.0
      %600 = vmatpush1.msra.mxu0 0.0
      %601 = vmatprep.subr.mxu0 0.0
      %602 = vmatpush1.msra.mxu0 0.0
      %603 = vmatprep.subr.mxu0 0.0
      %604 = vmatpush1.msra.mxu0 0.0
      %605 = vmatprep.subr.mxu0 0.0
      %606 = vmatpush1.msra.mxu0 0.0
      %607 = vmatprep.subr.mxu0 0.0
      %608 = vmatpush1.msra.mxu0 0.0
      %609 = vmatprep.subr.mxu0 0.0
      %610 = vmatpush1.msra.mxu0 0.0
      %611 = vmatprep.subr.mxu0 0.0
      %612 = vmatpush1.msra.mxu0 0.0
      %613 = vmatprep.subr.mxu0 0.0
      %614 = vmatpush1.msra.mxu0 0.0
      %615 = vmatprep.subr.mxu0 0.0
      %616 = vmatpush1.msra.mxu0 0.0
      %617 = vmatprep.subr.mxu0 0.0
      %618 = vmatpush1.msra.mxu0 %v432
      %619 = vmatprep.subr.mxu0 0.0
      %620 = vmatpush2.msra.mxu0 0.0
      %621 = vmatprep.subr.mxu0 0.0
      %622 = vmatpush2.msra.mxu0 0.0
      %623 = vmatprep.subr.mxu0 0.0
      %624 = vmatpush2.msra.mxu0 0.0
      %625 = vmatprep.subr.mxu0 0.0
      %626 = vmatpush2.msra.mxu0 0.0
      %627 = vmatprep.subr.mxu0 0.0
      %628 = vmatpush2.msra.mxu0 0.0
      %629 = vmatprep.subr.mxu0 0.0
      %630 = vmatpush2.msra.mxu0 0.0
      %631 = vmatprep.subr.mxu0 0.0
      %632 = vmatpush2.msra.mxu0 0.0
      %633 = vmatprep.subr.mxu0 0.0
      %634 = vmatpush2.msra.mxu0 0.0
      %635 = vmatprep.subr.mxu0 0.0
      %636 = vmatpush2.msra.mxu0 0.0
      %637 = vmatprep.subr.mxu0 0.0
      %638 = vmatpush2.msra.mxu0 0.0
      %639 = vmatprep.subr.mxu0 0.0
      %640 = vmatpush2.msra.mxu0 0.0
      %641 = vmatprep.subr.mxu0 0.0
      %642 = vmatpush2.msra.mxu0 0.0
      %643 = vmatprep.subr.mxu0 0.0
      %644 = vmatpush2.msra.mxu0 0.0
      %645 = vmatprep.subr.mxu0 0.0
      %646 = vmatpush2.msra.mxu0 0.0
      %647 = vmatprep.subr.mxu0 0.0
      %648 = vmatpush2.msra.mxu0 0.0
      %649 = vmatprep.subr.mxu0 0.0
      %650 = vmatpush2.msra.mxu0 0.0
      %651 = vmatprep.mubr.f32.mxu0 0.0
      %652 = vmatmul.mubr.f32.gmra.mxu0 %v564
      %v653 = vpop.f32.mrf.mxu0
      %v654 = vadd.f32 %v525, %v653
      %v655 = vpop.f32.mrf.mxu0
      %656 = vmatprep.mubr.f32.mxu0 0.0
      %657 = vmatmul.mubr.f32.gmra.mxu0 %v567
      %v658 = vpop.f32.mrf.mxu0
      %v659 = vadd.f32 %v530, %v658
      %v660 = vpop.f32.mrf.mxu0
      %661 = vmatprep.mubr.f32.mxu0 0.0
      %662 = vmatmul.mubr.f32.gmra.mxu0 %v570
      %v663 = vpop.f32.mrf.mxu0
      %v664 = vadd.f32 %v535, %v663
      %v665 = vpop.f32.mrf.mxu0
      %666 = vmatprep.mubr.f32.mxu0 0.0
      %667 = vmatmul.mubr.f32.gmra.mxu0 %v573
      %v668 = vpop.f32.mrf.mxu0
      %v669 = vadd.f32 %v540, %v668
      %v670 = vpop.f32.mrf.mxu0
      %671 = vmatprep.mubr.f32.mxu0 0.0
      %672 = vmatmul.mubr.f32.gmra.mxu0 %v576
      %v673 = vpop.f32.mrf.mxu0
      %v674 = vadd.f32 %v545, %v673
      %v675 = vpop.f32.mrf.mxu0
      %676 = vmatprep.mubr.f32.mxu0 0.0
      %677 = vmatmul.mubr.f32.gmra.mxu0 %v579
      %v678 = vpop.f32.mrf.mxu0
      %v679 = vadd.f32 %v550, %v678
      %v680 = vpop.f32.mrf.mxu0
      %681 = vmatprep.mubr.f32.mxu0 0.0
      %682 = vmatmul.mubr.f32.gmra.mxu0 %v582
      %v683 = vpop.f32.mrf.mxu0
      %v684 = vadd.f32 %v555, %v683
      %v685 = vpop.f32.mrf.mxu0
      %686 = vmatprep.mubr.f32.mxu0 0.0
      %687 = vmatmul.mubr.f32.gmra.mxu0 %v585
      %v688 = vpop.f32.mrf.mxu0
      %v689 = vadd.f32 %v560, %v688
      %v690 = vpop.f32.mrf.mxu0
      %691 = vdwg.mxu0
      %v692 = vld [vmem:[%s3] sm:$0x1]
      %v694 = vlaneseq
      %v695 = vshrl.u32 %v694, 7
      %v696 = vsub.s32 0, %v695
      %v697 = vrot.slane %v692, %v696
      %v699 = vmul.f32 %v376, %v697
      %v700 = vmul.f32 %v377, %v697
      %v701 = vmul.f32 %v378, %v697
      %v702 = vmul.f32 %v379, %v697
      %v703 = vmul.f32 %v380, %v697
      %v704 = vmul.f32 %v381, %v697
      %v705 = vmul.f32 %v382, %v697
      %v706 = vmul.f32 %v383, %v697
      %v707 = vsub.f32 %v654, %v699
      %v708 = vsub.f32 %v659, %v700
      %v709 = vsub.f32 %v664, %v701
      %v710 = vsub.f32 %v669, %v702
      %v711 = vsub.f32 %v674, %v703
      %v712 = vsub.f32 %v679, %v704
      %v713 = vsub.f32 %v684, %v705
      %v714 = vsub.f32 %v689, %v706
      %v715 = vmul.f32 %v424, %v707
      %v716 = vmul.f32 %v425, %v708
      %v717 = vmul.f32 %v426, %v709
      %v718 = vmul.f32 %v427, %v710
      %v719 = vmul.f32 %v428, %v711
      %v720 = vmul.f32 %v429, %v712
      %v721 = vmul.f32 %v430, %v713
      %v722 = vmul.f32 %v431, %v714
      %v723 = vld [vmem:[%s4] sm:$0x1]
      %v725 = vlaneseq
      %v726 = vshrl.u32 %v725, 7
      %v727 = vsub.s32 0, %v726
      %v728 = vrot.slane %v723, %v727
      %v730 = vadd.f32 %v715, %v728
      %v731 = vadd.f32 %v716, %v728
      %v732 = vadd.f32 %v717, %v728
      %v733 = vadd.f32 %v718, %v728
      %v734 = vadd.f32 %v719, %v728
      %v735 = vadd.f32 %v720, %v728
      %v736 = vadd.f32 %v721, %v728
      %v737 = vadd.f32 %v722, %v728
      %738 = vst.msk [vmem:[%s229] sm:$0xff] %vm247, %v730
      %739 = vst.msk [vmem:[%s229 + $0x8] sm:$0xff] %vm247, %v731
      %740 = vst.msk [vmem:[%s229 + $0x10] sm:$0xff] %vm247, %v732
      %741 = vst.msk [vmem:[%s229 + $0x18] sm:$0xff] %vm247, %v733
      %742 = vst.msk [vmem:[%s229 + $0x20] sm:$0xff] %vm247, %v734
      %743 = vst.msk [vmem:[%s229 + $0x28] sm:$0xff] %vm247, %v735
      %744 = vst.msk [vmem:[%s229 + $0x30] sm:$0xff] %vm247, %v736
      %745 = vst.msk [vmem:[%s229 + $0x38] sm:$0xff] %vm247, %v737
      %s746 = smul.u32 8, %s16
      %p747 = scmp.lt.s32.totalorder %s746, 15
      %s748 = scalar_select %p747, %s746, 15
      %s749 = smul.addr %s748, 8
      %s750 = scalar_lea.vmem %s5, %s749
      // Predicated region
      $region41: #{patch_merging_fused.1} parent=39 // pred_check
        %p751 = pneg %p144
      $region42: #{patch_merging_fused.1} parent=39 // pred_check_branch
        %753 = sbr.rel (%p751) target = $region44
      $region43: #{patch_merging_fused.1} parent=39 // pred_region
        %s754 = smul.u32 8, %s16
      $region44: #{patch_merging_fused.1} parent=39 // pred_fallthru
        _
    $region40: #{patch_merging_fused.1} parent=5 // pred_fallthru
      _
    %p755 = scmp.le.s32.totalorder 2, %s11
    // Predicated region
    $region45: #{patch_merging_fused.1} parent=5 // pred_check
      %p756 = pneg %p755
    $region46: #{patch_merging_fused.1} parent=5 // pred_check_branch
      %758 = sbr.rel (%p756) target = $region48
    $region47: #{patch_merging_fused.1} parent=5 // pred_region
      %s759 = ssub.s32 %s11, 2
      // Predicated region
      $region49: #{patch_merging_fused.1} parent=47 // pred_check
        %p760 = pneg %p150
      $region50: #{patch_merging_fused.1} parent=47 // pred_check_branch
        %762 = sbr.rel (%p760) target = $region52
      $region51: #{patch_merging_fused.1} parent=47 // pred_region
        %s763 = smul.u32 8, %s17
        %p764 = scmp.lt.s32.totalorder %s763, 15
        %s765 = scalar_select %p764, %s763, 15
        %s766 = smul.addr %s765, 8
        %s767 = scalar_lea.vmem %s5, %s766
      $region52: #{patch_merging_fused.1} parent=47 // pred_fallthru
        _
    $region48: #{patch_merging_fused.1} parent=5 // pred_fallthru
      _
  $region6: #{patch_merging_fused.1} parent=0 // loop_footer
    %s15 = sadd.s32 1, %s11
  $region7: #{patch_merging_fused.1} parent=0 // loop_footer_branch
    %10 = sbr.rel target = $region3
  $region8: #{patch_merging_fused.1} parent=0 // loop_exit
    _

</llo_original>
